<compile_context>
chip_gen: v6e
topology: v6e:2x2x1
jax: 0.10.0
libtpu: 0.0.40
codegen_flags: <defaults>
</compile_context>

<pallas_src>
import jax
import jax.numpy as jnp
import numpy as np
from jax.experimental import pallas as pl
from jax.experimental.pallas import tpu as pltpu

_EPS = 1e-5  # BatchNorm1d default eps
_VMEM_LIMIT = 32 * 1024 * 1024


# ---------------------------------------------------------------------------
# Kernel factories
# ---------------------------------------------------------------------------

def _make_conv_call(B, Ci, nf, outc, k, s, L_out, Lp_phase):
    """Fused grouped 1x1 bottleneck + grouped k-tap strided conv for one layer.

    grid=(B,) ("parallel").  Per sample (all MXU matmuls, channels on lanes):
      f_r  = x_phase_r @ WbT                      r = 0..s-1      (Lp_phase, nf)
      acc += f_{j%s}[j//s : j//s + L_out] @ WcT[j]  j = 0..k-1      (L_out, outc)
      y    = acc + bias
    Also emits per-sample (sum, sum-of-squares) over time for the BN pass.
    """

    def kernel(xph_ref, wbT_ref, wcT_ref, bias_ref, y_ref, st_ref):
        wbT = wbT_ref[...]                                          # (Ci, nf)
        # Grouped 1x1 bottleneck as one dense block-diagonal matmul per phase.
        f_ph = [
            jnp.dot(xph_ref[r, 0], wbT, preferred_element_type=jnp.float32)
            for r in range(s)
        ]                                                           # each (Lp_phase, nf)
        acc = jnp.zeros((L_out, outc), jnp.float32)
        for j in range(k):                                          # static unroll over taps
            off = j // s
            fj = f_ph[j % s][off:off + L_out, :]                    # (L_out, nf)
            acc = acc + jnp.dot(fj, wcT_ref[j],
                                preferred_element_type=jnp.float32)  # (L_out, outc)
        y = acc + bias_ref[...]                                     # (L_out, outc)
        y_ref[0] = y
        st_ref[0] = jnp.concatenate(
            [jnp.sum(y, axis=0, keepdims=True),
             jnp.sum(y * y, axis=0, keepdims=True)], axis=0)        # (2, outc)

    flops = 2 * B * (s * Lp_phase * Ci * nf + k * L_out * nf * outc)
    bytes_accessed = 4 * (s * B * Lp_phase * Ci + Ci * nf + k * nf * outc + outc
                          + B * L_out * outc + 2 * B * outc)

    return pl.pallas_call(
        kernel,
        grid=(B,),
        in_specs=[
            pl.BlockSpec((s, 1, Lp_phase, Ci), lambda b: (0, b, 0, 0)),
            pl.BlockSpec((Ci, nf), lambda b: (0, 0)),
            pl.BlockSpec((k, nf, outc), lambda b: (0, 0, 0)),
            pl.BlockSpec((1, outc), lambda b: (0, 0)),
        ],
        out_specs=(
            pl.BlockSpec((1, L_out, outc), lambda b: (b, 0, 0)),
            pl.BlockSpec((1, 2, outc), lambda b: (b, 0, 0)),
        ),
        out_shape=(
            jax.ShapeDtypeStruct((B, L_out, outc), jnp.float32),
            jax.ShapeDtypeStruct((B, 2, outc), jnp.float32),
        ),
        compiler_params=pltpu.CompilerParams(
            dimension_semantics=("parallel",),
            vmem_limit_bytes=_VMEM_LIMIT),
        cost_estimate=pl.CostEstimate(flops=flops, transcendentals=0,
                                      bytes_accessed=bytes_accessed),
    )


def _make_bn_call(B, outc, L_out, with_pool):
    """BatchNorm1d (training-mode batch stats) + ReLU, tiled over B ("parallel").

    Takes the tiny (B, 2, outc) partial-stats array untiled; for the last layer it
    also fuses AdaptiveAvgPool1d(1) as a sublane mean (lane-dense (1, outc) output).
    """
    inv_n = 1.0 / float(B * L_out)

    def kernel(y_ref, st_ref, gamma_ref, beta_ref, o_ref, *pool_ref):
        tot = jnp.sum(st_ref[...], axis=0)                          # (2, outc)
        mean = tot[0:1, :] * inv_n                                  # (1, outc)
        var = tot[1:2, :] * inv_n - mean * mean                     # (1, outc)
        scale = gamma_ref[...] * jax.lax.rsqrt(var + _EPS)
        shift = beta_ref[...] - mean * scale
        h = jnp.maximum(y_ref[0] * scale + shift, 0.0)              # (L_out, outc)
        o_ref[0] = h
        if with_pool:                                               # fused AdaptiveAvgPool1d(1)
            pool_ref[0][0] = jnp.mean(h, axis=0, keepdims=True)     # (1, outc)

    in_specs = [
        pl.BlockSpec((1, L_out, outc), lambda b: (b, 0, 0)),
        pl.BlockSpec((B, 2, outc), lambda b: (0, 0, 0)),
        pl.BlockSpec((1, outc), lambda b: (0, 0)),
        pl.BlockSpec((1, outc), lambda b: (0, 0)),
    ]
    out_specs = pl.BlockSpec((1, L_out, outc), lambda b: (b, 0, 0))
    out_shape = jax.ShapeDtypeStruct((B, L_out, outc), jnp.float32)
    if with_pool:
        out_specs = (out_specs, pl.BlockSpec((1, 1, outc), lambda b: (b, 0, 0)))
        out_shape = (out_shape, jax.ShapeDtypeStruct((B, 1, outc), jnp.float32))

    flops = B * (6 * L_out * outc + 10 * outc)
    bytes_accessed = 4 * (2 * B * L_out * outc + 2 * B * outc + 2 * outc
                          + (B * outc if with_pool else 0))
    return pl.pallas_call(
        kernel,
        grid=(B,),
        in_specs=in_specs,
        out_specs=out_specs,
        out_shape=out_shape,
        compiler_params=pltpu.CompilerParams(
            dimension_semantics=("parallel",),
            vmem_limit_bytes=_VMEM_LIMIT),
        cost_estimate=pl.CostEstimate(flops=flops, transcendentals=B * outc,
                                      bytes_accessed=bytes_accessed),
    )


# ---------------------------------------------------------------------------
# Wrapper-side layout plumbing (dense block-diagonal weights, stride phases)
# ---------------------------------------------------------------------------

def _dense_bottleneckT(w, ng):
    """Grouped 1x1 conv weight (Co, Ci//ng, 1) -> dense transposed (Ci, Co)."""
    Co, Ci_pg, _ = w.shape
    co_pg = Co // ng
    Ci = Ci_pg * ng
    dense = jnp.zeros((Ci, Co), w.dtype)
    for g in range(ng):
        blk = jnp.transpose(w[g * co_pg:(g + 1) * co_pg, :, 0])      # (Ci_pg, co_pg)
        dense = dense.at[g * Ci_pg:(g + 1) * Ci_pg,
                         g * co_pg:(g + 1) * co_pg].set(blk)
    return dense


def _dense_conv_tapsT(w, ng):
    """Grouped conv weight (Co, Ci//ng, k) -> dense per-tap transposed (k, Ci, Co)."""
    Co, Ci_pg, k = w.shape
    co_pg = Co // ng
    Ci = Ci_pg * ng
    dense = jnp.zeros((k, Ci, Co), w.dtype)
    for g in range(ng):
        blk = jnp.transpose(w[g * co_pg:(g + 1) * co_pg], (2, 1, 0))  # (k, Ci_pg, co_pg)
        dense = dense.at[:, g * Ci_pg:(g + 1) * Ci_pg,
                         g * co_pg:(g + 1) * co_pg].set(blk)
    return dense


def _phase_views(h_cl, k, s, L_out, Lp_phase):
    """Zero-pad along time and split into `s` stride phases (layout plumbing only).

    h_cl: (B, L, Ci) channels-last.  Returns (s, B, Lp_phase, Ci) with
    phases[r, b, u, :] = padded_input[b, s*u + r, :] (zero where out of range),
    so that out[t] = sum_j W[j] . phase_{j%s}[t + j//s]  -- strided conv computed
    directly at the L_out output positions.
    """
    pad = k // 2
    fp = jnp.pad(h_cl, ((0, 0), (pad, pad), (0, 0)))
    phases = []
    for r in range(s):
        pr = fp[:, r::s, :]
        cur = pr.shape[1]
        if cur >= Lp_phase:
            pr = pr[:, :Lp_phase, :]
        else:
            pr = jnp.pad(pr, ((0, 0), (0, Lp_phase - cur), (0, 0)))
        phases.append(pr)
    return jnp.stack(phases, axis=0)


# ---------------------------------------------------------------------------
# Network
# ---------------------------------------------------------------------------

def init_inception_network(key, num_layers, ni, nf, stride=3, dropout_p=0.0):
    ng = ni
    assert nf % ng == 0
    k = 3                                           # nn.Conv1d(nf, nf*4, 3, ...)
    if stride > 1:
        stride = stride // 2 * 2                    # 3 -> 2, as in the module
    outc = 4 * nf
    assert outc % ng == 0
    layers = []
    for idx in range(num_layers):
        ci = ni if idx == 0 else outc
        assert ci % ng == 0
        key, kb, kw, kbias, kg, kbe = jax.random.split(key, 6)
        wb = jax.random.normal(kb, (nf, ci // ng, 1), jnp.float32) / np.sqrt(ci // ng)
        fan_in = (nf // ng) * k
        wc = jax.random.normal(kw, (outc, nf // ng, k), jnp.float32) / np.sqrt(fan_in)
        bc = 0.1 * jax.random.normal(kbias, (outc,), jnp.float32)
        gamma = 1.0 + 0.1 * jax.random.normal(kg, (outc,), jnp.float32)
        beta = 0.1 * jax.random.normal(kbe, (outc,), jnp.float32)
        layers.append(dict(wb=wb, wc=wc, bc=bc, gamma=gamma, beta=beta))
    return dict(layers=layers, ng=ng, nf=nf, k=k, stride=stride, outc=outc,
                dropout_p=dropout_p)


def inception_network_pallas(params, x):
    ng, nf, k = params["ng"], params["nf"], params["k"]
    s, outc = params["stride"], params["outc"]
    n_layers = len(params["layers"])
    B = x.shape[0]

    h = jnp.transpose(x.astype(jnp.float32), (0, 2, 1))   # (B, L, C) channels-last
    pooled = None
    for li, layer in enumerate(params["layers"]):
        _, L, Ci = h.shape
        pad = k // 2
        L_out = (L + 2 * pad - k) // s + 1
        Lp_phase = L_out + (k - 1) // s

        xph = _phase_views(h, k, s, L_out, Lp_phase)       # (s, B, Lp_phase, Ci)
        wbT = _dense_bottleneckT(layer["wb"], ng)          # (Ci, nf)
        wcT = _dense_conv_tapsT(layer["wc"], ng)           # (k, nf, outc)
        bias = layer["bc"].reshape(1, outc)
        gamma = layer["gamma"].reshape(1, outc)
        beta = layer["beta"].reshape(1, outc)

        y, stats = _make_conv_call(B, Ci, nf, outc, k, s, L_out, Lp_phase)(
            xph, wbT, wcT, bias)

        with_pool = li == n_layers - 1
        bn_call = _make_bn_call(B, outc, L_out, with_pool)
        if with_pool:
            h, pooled = bn_call(y, stats, gamma, beta)
        else:
            h = bn_call(y, stats, gamma, beta)
        # TODO(synk): DropoutTimeSeriesChannels (nn.Dropout2d) with p > 0 is not
        # implemented; the module default dropout_p=0.0 makes it an identity.

    return jnp.transpose(pooled, (0, 2, 1))                # (B, outc, 1)


# ---------------------------------------------------------------------------
# Pure-JAX reference (mirrors the torch forward in train mode)
# ---------------------------------------------------------------------------

def inception_network_reference(params, x):
    ng, k, s = params["ng"], params["k"], params["stride"]
    pad = k // 2
    h = x.astype(jnp.float32)
    for layer in params["layers"]:
        f = jax.lax.conv_general_dilated(
            h, layer["wb"], window_strides=(1,), padding=[(0, 0)],
            dimension_numbers=("NCH", "OIH", "NCH"), feature_group_count=ng,
            precision=jax.lax.Precision.HIGHEST)
        c = jax.lax.conv_general_dilated(
            f, layer["wc"], window_strides=(s,), padding=[(pad, pad)],
            dimension_numbers=("NCH", "OIH", "NCH"), feature_group_count=ng,
            precision=jax.lax.Precision.HIGHEST)
        c = c + layer["bc"].reshape(1, -1, 1)
        mean = jnp.mean(c, axis=(0, 2), keepdims=True)
        var = jnp.mean((c - mean) ** 2, axis=(0, 2), keepdims=True)
        hn = (c - mean) / jnp.sqrt(var + _EPS)
        h = jnp.maximum(hn * layer["gamma"].reshape(1, -1, 1)
                        + layer["beta"].reshape(1, -1, 1), 0.0)
    return jnp.mean(h, axis=-1, keepdims=True)


if __name__ == "__main__":
    key = jax.random.PRNGKey(0)
    B, ni, nf, L = 2, 4, 8, 16
    num_layers = 2

    key, kx, kp = jax.random.split(key, 3)
    x = jax.random.normal(kx, (B, ni, L), jnp.float32)
    params = init_inception_network(kp, num_layers, ni, nf, stride=3, dropout_p=0.0)

    out = inception_network_pallas(params, x)
    out = jax.block_until_ready(out)

    ref = inception_network_reference(params, x)
    assert out.shape == (B, params["outc"], 1), out.shape
    np.testing.assert_allclose(np.asarray(out), np.asarray(ref), rtol=5e-3, atol=5e-3)
    print("KERNEL_OK")
</pallas_src>

<mosaic_0001>
module attributes {stable_mosaic.version = 11 : i64} {
  func.func @kernel(%arg0: i32, %arg1: memref<2x1x9x4xf32, #tpu.memory_space<vmem>>, %arg2: memref<4x8xf32, #tpu.memory_space<vmem>>, %arg3: memref<3x8x32xf32, #tpu.memory_space<vmem>>, %arg4: memref<1x32xf32, #tpu.memory_space<vmem>>, %arg5: memref<1x8x32xf32, #tpu.memory_space<vmem>>, %arg6: memref<1x2x32xf32, #tpu.memory_space<vmem>>) attributes {dimension_semantics = [#tpu.dimension_semantics<parallel>], iteration_bounds = array<i64: 2>, scalar_prefetch = 0 : i64, scratch_operands = 0 : i64, tpu.core_type = #tpu.core_type<tc>, window_params = [{transform_indices = @transform_0, window_bounds = array<i64: 2, 1, 9, 4>}, {pipeline_mode = #tpu.pipeline_mode<synchronous>, transform_indices = @transform_1, window_bounds = array<i64: 4, 8>}, {pipeline_mode = #tpu.pipeline_mode<synchronous>, transform_indices = @transform_2, window_bounds = array<i64: 3, 8, 32>}, {pipeline_mode = #tpu.pipeline_mode<synchronous>, transform_indices = @transform_3, window_bounds = array<i64: 1, 32>}, {transform_indices = @transform_4, window_bounds = array<i64: 1, 8, 32>}, {transform_indices = @transform_5, window_bounds = array<i64: 1, 2, 32>}]} {
    %c0 = arith.constant 0 : index
    %c0_0 = arith.constant 0 : index
    %0 = vector.load %arg2[%c0, %c0_0] : memref<4x8xf32, #tpu.memory_space<vmem>>, vector<4x8xf32>
    %c0_1 = arith.constant 0 : index
    %c0_2 = arith.constant 0 : index
    %c0_3 = arith.constant 0 : index
    %c0_4 = arith.constant 0 : index
    %1 = vector.load %arg1[%c0_1, %c0_2, %c0_3, %c0_4] : memref<2x1x9x4xf32, #tpu.memory_space<vmem>>, vector<1x1x9x4xf32>
    %2 = vector.shape_cast %1 : vector<1x1x9x4xf32> to vector<9x4xf32>
    %cst = arith.constant dense<0.000000e+00> : vector<9x8xf32>
    %3 = tpu.matmul %2, %0, %cst {dimension_numbers = #tpu.dot_dimension_numbers<[1], [0], [0], [1], [0, 0, 1, 1], [], []>} : vector<9x4xf32>, vector<4x8xf32>, vector<9x8xf32> -> vector<9x8xf32>
    %c1 = arith.constant 1 : index
    %c0_5 = arith.constant 0 : index
    %c0_6 = arith.constant 0 : index
    %c0_7 = arith.constant 0 : index
    %4 = vector.load %arg1[%c1, %c0_5, %c0_6, %c0_7] : memref<2x1x9x4xf32, #tpu.memory_space<vmem>>, vector<1x1x9x4xf32>
    %5 = vector.shape_cast %4 : vector<1x1x9x4xf32> to vector<9x4xf32>
    %cst_8 = arith.constant dense<0.000000e+00> : vector<9x8xf32>
    %6 = tpu.matmul %5, %0, %cst_8 {dimension_numbers = #tpu.dot_dimension_numbers<[1], [0], [0], [1], [0, 0, 1, 1], [], []>} : vector<9x4xf32>, vector<4x8xf32>, vector<9x8xf32> -> vector<9x8xf32>
    %cst_9 = arith.constant 0.000000e+00 : f32
    %7 = vector.broadcast %cst_9 : f32 to vector<8x32xf32>
    %8 = vector.extract_strided_slice %3 {offsets = [0, 0], sizes = [8, 8], strides = [1, 1]} : vector<9x8xf32> to vector<8x8xf32>
    %c0_10 = arith.constant 0 : index
    %c0_11 = arith.constant 0 : index
    %c0_12 = arith.constant 0 : index
    %9 = vector.load %arg3[%c0_10, %c0_11, %c0_12] : memref<3x8x32xf32, #tpu.memory_space<vmem>>, vector<1x8x32xf32>
    %10 = vector.shape_cast %9 : vector<1x8x32xf32> to vector<8x32xf32>
    %cst_13 = arith.constant dense<0.000000e+00> : vector<8x32xf32>
    %11 = tpu.matmul %8, %10, %cst_13 {dimension_numbers = #tpu.dot_dimension_numbers<[1], [0], [0], [1], [0, 0, 1, 1], [], []>} : vector<8x8xf32>, vector<8x32xf32>, vector<8x32xf32> -> vector<8x32xf32>
    %12 = arith.addf %7, %11 : vector<8x32xf32>
    %13 = vector.extract_strided_slice %6 {offsets = [0, 0], sizes = [8, 8], strides = [1, 1]} : vector<9x8xf32> to vector<8x8xf32>
    %c1_14 = arith.constant 1 : index
    %c0_15 = arith.constant 0 : index
    %c0_16 = arith.constant 0 : index
    %14 = vector.load %arg3[%c1_14, %c0_15, %c0_16] : memref<3x8x32xf32, #tpu.memory_space<vmem>>, vector<1x8x32xf32>
    %15 = vector.shape_cast %14 : vector<1x8x32xf32> to vector<8x32xf32>
    %cst_17 = arith.constant dense<0.000000e+00> : vector<8x32xf32>
    %16 = tpu.matmul %13, %15, %cst_17 {dimension_numbers = #tpu.dot_dimension_numbers<[1], [0], [0], [1], [0, 0, 1, 1], [], []>} : vector<8x8xf32>, vector<8x32xf32>, vector<8x32xf32> -> vector<8x32xf32>
    %17 = arith.addf %12, %16 : vector<8x32xf32>
    %18 = vector.extract_strided_slice %3 {offsets = [1, 0], sizes = [8, 8], strides = [1, 1]} : vector<9x8xf32> to vector<8x8xf32>
    %c2 = arith.constant 2 : index
    %c0_18 = arith.constant 0 : index
    %c0_19 = arith.constant 0 : index
    %19 = vector.load %arg3[%c2, %c0_18, %c0_19] : memref<3x8x32xf32, #tpu.memory_space<vmem>>, vector<1x8x32xf32>
    %20 = vector.shape_cast %19 : vector<1x8x32xf32> to vector<8x32xf32>
    %cst_20 = arith.constant dense<0.000000e+00> : vector<8x32xf32>
    %21 = tpu.matmul %18, %20, %cst_20 {dimension_numbers = #tpu.dot_dimension_numbers<[1], [0], [0], [1], [0, 0, 1, 1], [], []>} : vector<8x8xf32>, vector<8x32xf32>, vector<8x32xf32> -> vector<8x32xf32>
    %22 = arith.addf %17, %21 : vector<8x32xf32>
    %c0_21 = arith.constant 0 : index
    %c0_22 = arith.constant 0 : index
    %23 = vector.load %arg4[%c0_21, %c0_22] : memref<1x32xf32, #tpu.memory_space<vmem>>, vector<1x32xf32>
    %24 = vector.broadcast %23 : vector<1x32xf32> to vector<8x32xf32>
    %25 = arith.addf %22, %24 : vector<8x32xf32>
    %c0_23 = arith.constant 0 : index
    %c0_24 = arith.constant 0 : index
    %c0_25 = arith.constant 0 : index
    %26 = vector.load %arg5[%c0_23, %c0_24, %c0_25] : memref<1x8x32xf32, #tpu.memory_space<vmem>>, vector<1x8x32xf32>
    %27 = vector.shape_cast %26 : vector<1x8x32xf32> to vector<8x32xf32>
    %28 = vector.shape_cast %25 : vector<8x32xf32> to vector<1x8x32xf32>
    tpu.vector_store %arg5[%c0_23, %c0_24, %c0_25], %28 {strides = array<i32>} : memref<1x8x32xf32, #tpu.memory_space<vmem>>, vector<1x8x32xf32>,
    %cst_26 = arith.constant dense<0.000000e+00> : vector<32xf32>
    %29 = vector.multi_reduction <add>, %25, %cst_26 [0] : vector<8x32xf32> to vector<32xf32>
    %30 = vector.shape_cast %29 : vector<32xf32> to vector<1x32xf32>
    %31 = arith.mulf %25, %25 : vector<8x32xf32>
    %cst_27 = arith.constant dense<0.000000e+00> : vector<32xf32>
    %32 = vector.multi_reduction <add>, %31, %cst_27 [0] : vector<8x32xf32> to vector<32xf32>
    %33 = vector.shape_cast %32 : vector<32xf32> to vector<1x32xf32>
    %34 = tpu.concatenate %30, %33 in 0 : vector<1x32xf32>, vector<1x32xf32> -> vector<2x32xf32>
    %c0_28 = arith.constant 0 : index
    %c0_29 = arith.constant 0 : index
    %c0_30 = arith.constant 0 : index
    %35 = vector.load %arg6[%c0_28, %c0_29, %c0_30] : memref<1x2x32xf32, #tpu.memory_space<vmem>>, vector<1x2x32xf32>
    %36 = vector.shape_cast %35 : vector<1x2x32xf32> to vector<2x32xf32>
    %37 = vector.shape_cast %34 : vector<2x32xf32> to vector<1x2x32xf32>
    tpu.vector_store %arg6[%c0_28, %c0_29, %c0_30], %37 {strides = array<i32>} : memref<1x2x32xf32, #tpu.memory_space<vmem>>, vector<1x2x32xf32>,
    return
  }
  func.func @transform_0(%arg0: i32) -> (i32, i32, i32, i32) {
    %c0_i32 = arith.constant 0 : i32
    %c0_i32_0 = arith.constant 0 : i32
    %c0_i32_1 = arith.constant 0 : i32
    %c0_i32_2 = arith.constant 0 : i32
    return %c0_i32, %arg0, %c0_i32_0, %c0_i32_1 : i32, i32, i32, i32
  }
  func.func @transform_1(%arg0: i32) -> (i32, i32) {
    %c0_i32 = arith.constant 0 : i32
    %c0_i32_0 = arith.constant 0 : i32
    %c0_i32_1 = arith.constant 0 : i32
    return %c0_i32, %c0_i32_0 : i32, i32
  }
  func.func @transform_2(%arg0: i32) -> (i32, i32, i32) {
    %c0_i32 = arith.constant 0 : i32
    %c0_i32_0 = arith.constant 0 : i32
    %c0_i32_1 = arith.constant 0 : i32
    %c0_i32_2 = arith.constant 0 : i32
    return %c0_i32, %c0_i32_0, %c0_i32_1 : i32, i32, i32
  }
  func.func @transform_3(%arg0: i32) -> (i32, i32) {
    %c0_i32 = arith.constant 0 : i32
    %c0_i32_0 = arith.constant 0 : i32
    %c0_i32_1 = arith.constant 0 : i32
    return %c0_i32, %c0_i32_0 : i32, i32
  }
  func.func @transform_4(%arg0: i32) -> (i32, i32, i32) {
    %c0_i32 = arith.constant 0 : i32
    %c0_i32_0 = arith.constant 0 : i32
    %c0_i32_1 = arith.constant 0 : i32
    return %arg0, %c0_i32, %c0_i32_0 : i32, i32, i32
  }
  func.func @transform_5(%arg0: i32) -> (i32, i32, i32) {
    %c0_i32 = arith.constant 0 : i32
    %c0_i32_0 = arith.constant 0 : i32
    %c0_i32_1 = arith.constant 0 : i32
    return %arg0, %c0_i32, %c0_i32_0 : i32, i32, i32
  }
}

</mosaic_0001>

<llo_original>
// kernel: tpu_custom_call.1
$region0: #{tpu_custom_call.1}
  #allocation0 [shape = 'u32[]', space=smem, size = 0x4, offset = 0x4, fixed_abs, tag = 'smem constant byte address 0x4 - core index']
  #allocation1 [shape = 'u32[144,128]{1,0:T(1,128)}', space=vmem, size = 0x12000, scoped, tag = 'internal scratch']
  %s0 = inlined_call_operand.vmem [shape: f32[2,2,9,4], index: 0, kind: input, shape index: {}]
  %s1 = inlined_call_operand.vmem [shape: f32[4,8], index: 1, kind: input, shape index: {}]
  %s2 = inlined_call_operand.vmem [shape: f32[3,8,32], index: 2, kind: input, shape index: {}]
  %s3 = inlined_call_operand.vmem [shape: f32[1,32], index: 3, kind: input, shape index: {}]
  %s4 = inlined_call_operand.hbm [shape: f32[2,8,32], index: 4, kind: output, shape index: {0}]
  %s5 = inlined_call_operand.hbm [shape: f32[2,2,32], index: 5, kind: output, shape index: {1}]
  %6 = xla_tuple %s4, %s5
  %s7 = sld [smem:[#allocation0]]
  $region95: #{tpu_custom_call.1} parent=0
    _
  %s9 = ssub.s32 1, %s7
  %s10 = scalar_select 0, %s9, %s7
  $region1: #{tpu_custom_call.1} parent=0
    #allocation2 [shape = 'u8[32768]{0}', space=vmem, size = 0x8000, scoped, tag = 'input window, operand 0']
    #allocation3 [shape = 'u8[8192]{0}', space=vmem, size = 0x2000, scoped, tag = 'output window, operand 0']
    #allocation4 [shape = 's32[2]{0}', space=sflag, size = 0x8, scoped, tag = 'scoped memory for tpu_custom_call.1']
    #allocation5 [shape = 'u8[2048]{0}', space=vmem, size = 0x800, scoped, tag = 'output window, operand 1']
    #allocation6 [shape = 's32[2]{0}', space=sflag, size = 0x8, scoped, tag = 'scoped memory for tpu_custom_call.1']
    %11 = vsyncpa [#allocation4], 0
    %s12 = scalar_lea.sflag [#allocation4], 1
    %13 = vsyncpa %s12, 0
    %14 = vsyncpa [#allocation6], 0
    %s15 = scalar_lea.sflag [#allocation6], 1
    %16 = vsyncpa %s15, 0
    loop: start=0, step=1, limit=4
    $region2: #{tpu_custom_call.1} parent=1 // loop_pre_header
      _
    $region3: #{tpu_custom_call.1} parent=1 // loop_header
      %s18 = sphi 0, %s22
      %p19 = scmp.ge.s32.totalorder %s18, 4
      %s28 = sphi 0, %s30
      %s31 = sphi 0, %s28
      %s32 = sphi 0, %s31
      %s48 = sphi 0, %s32
      %s52 = sphi 0, %s52
      %s54 = sphi 0, %s52
      %s55 = sphi 0, %s54
      %s69 = sphi 0, %s55
      %s73 = sphi 0, %s73
      %s75 = sphi 0, %s73
      %s76 = sphi 0, %s75
      %s90 = sphi 0, %s76
      %s94 = sphi 0, %s94
      %s96 = sphi 0, %s94
      %s97 = sphi 0, %s96
      %s111 = sphi 0, %s97
      %s117 = sphi 0, %s119
      %s120 = sphi 0, %s117
      %s121 = sphi 0, %s120
      %s137 = sphi 0, %s121
      %s143 = sphi 0, %s145
      %s146 = sphi 0, %s143
      %s147 = sphi 0, %s146
      %s163 = sphi 0, %s147
    $region4: #{tpu_custom_call.1} parent=1 // loop_header_branch
      %21 = sbr.rel (%p19) target = $region8
    $region5: #{tpu_custom_call.1} parent=1 // loop_body
      %s23 = ssub.s32 %s18, 1
      %s24 = ssub.s32 %s18, 2
      %s25 = sadd.s32 %s18, 1
      %s26 = ssub.s32 %s18, %s25
      %p27 = scmp.eq.s32.totalorder %s26, 0
      %s29 = sadd.s32 %s28, 1
      %s30 = scalar_select %p27, %s28, %s29
      %p33 = pneg %p27
      %p34 = scmp.eq.s32.totalorder %s18, 1
      %p35 = por %p33, %p34
      %p36 = scmp.ne.s32.totalorder %s28, %s31
      %p37 = scmp.eq.s32.totalorder %s18, 0
      %p38 = por %p36, %p37
      %p39 = scmp.ne.s32.totalorder %s28, %s31
      %p40 = scmp.eq.s32.totalorder %s23, 1
      %p41 = por %p39, %p40
      %p42 = scmp.ne.s32.totalorder %s31, %s32
      %p43 = scmp.eq.s32.totalorder %s23, 0
      %p44 = por %p42, %p43
      %p45 = scmp.ne.s32.totalorder %s31, %s32
      %p46 = scmp.eq.s32.totalorder %s24, 1
      %p47 = por %p45, %p46
      %p49 = scmp.ne.s32.totalorder %s32, %s48
      %p50 = scmp.eq.s32.totalorder %s24, 0
      %p51 = por %p49, %p50
      %s53 = sadd.s32 %s52, 1
      %p56 = scmp.eq.s32.totalorder %s18, 1
      %p57 = scmp.ne.s32.totalorder %s52, %s54
      %p58 = scmp.eq.s32.totalorder %s18, 0
      %p59 = por %p57, %p58
      %p60 = scmp.ne.s32.totalorder %s52, %s54
      %p61 = scmp.eq.s32.totalorder %s23, 1
      %p62 = por %p60, %p61
      %p63 = scmp.ne.s32.totalorder %s54, %s55
      %p64 = scmp.eq.s32.totalorder %s23, 0
      %p65 = por %p63, %p64
      %p66 = scmp.ne.s32.totalorder %s54, %s55
      %p67 = scmp.eq.s32.totalorder %s24, 1
      %p68 = por %p66, %p67
      %p70 = scmp.ne.s32.totalorder %s55, %s69
      %p71 = scmp.eq.s32.totalorder %s24, 0
      %p72 = por %p70, %p71
      %s74 = sadd.s32 %s73, 1
      %p77 = scmp.eq.s32.totalorder %s18, 1
      %p78 = scmp.ne.s32.totalorder %s73, %s75
      %p79 = scmp.eq.s32.totalorder %s18, 0
      %p80 = por %p78, %p79
      %p81 = scmp.ne.s32.totalorder %s73, %s75
      %p82 = scmp.eq.s32.totalorder %s23, 1
      %p83 = por %p81, %p82
      %p84 = scmp.ne.s32.totalorder %s75, %s76
      %p85 = scmp.eq.s32.totalorder %s23, 0
      %p86 = por %p84, %p85
      %p87 = scmp.ne.s32.totalorder %s75, %s76
      %p88 = scmp.eq.s32.totalorder %s24, 1
      %p89 = por %p87, %p88
      %p91 = scmp.ne.s32.totalorder %s76, %s90
      %p92 = scmp.eq.s32.totalorder %s24, 0
      %p93 = por %p91, %p92
      %s95 = sadd.s32 %s94, 1
      %p98 = scmp.eq.s32.totalorder %s18, 1
      %p99 = scmp.ne.s32.totalorder %s94, %s96
      %p100 = scmp.eq.s32.totalorder %s18, 0
      %p101 = por %p99, %p100
      %p102 = scmp.ne.s32.totalorder %s94, %s96
      %p103 = scmp.eq.s32.totalorder %s23, 1
      %p104 = por %p102, %p103
      %p105 = scmp.ne.s32.totalorder %s96, %s97
      %p106 = scmp.eq.s32.totalorder %s23, 0
      %p107 = por %p105, %p106
      %p108 = scmp.ne.s32.totalorder %s96, %s97
      %p109 = scmp.eq.s32.totalorder %s24, 1
      %p110 = por %p108, %p109
      %p112 = scmp.ne.s32.totalorder %s97, %s111
      %p113 = scmp.eq.s32.totalorder %s24, 0
      %p114 = por %p112, %p113
      %s115 = ssub.s32 %s18, %s25
      %p116 = scmp.eq.s32.totalorder %s115, 0
      %s118 = sadd.s32 %s117, 1
      %s119 = scalar_select %p116, %s117, %s118
      %p122 = pneg %p116
      %p123 = scmp.eq.s32.totalorder %s18, 1
      %p124 = por %p122, %p123
      %p125 = scmp.ne.s32.totalorder %s117, %s120
      %p126 = scmp.eq.s32.totalorder %s18, 0
      %p127 = por %p125, %p126
      %p128 = scmp.ne.s32.totalorder %s117, %s120
      %p129 = scmp.eq.s32.totalorder %s23, 1
      %p130 = por %p128, %p129
      %p131 = scmp.ne.s32.totalorder %s120, %s121
      %p132 = scmp.eq.s32.totalorder %s23, 0
      %p133 = por %p131, %p132
      %p134 = scmp.ne.s32.totalorder %s120, %s121
      %p135 = scmp.eq.s32.totalorder %s24, 1
      %p136 = por %p134, %p135
      %p138 = scmp.ne.s32.totalorder %s121, %s137
      %p139 = scmp.eq.s32.totalorder %s24, 0
      %p140 = por %p138, %p139
      %s141 = ssub.s32 %s18, %s25
      %p142 = scmp.eq.s32.totalorder %s141, 0
      %s144 = sadd.s32 %s143, 1
      %s145 = scalar_select %p142, %s143, %s144
      %p148 = pneg %p142
      %p149 = scmp.eq.s32.totalorder %s18, 1
      %p150 = por %p148, %p149
      %p151 = scmp.ne.s32.totalorder %s143, %s146
      %p152 = scmp.eq.s32.totalorder %s18, 0
      %p153 = por %p151, %p152
      %p154 = scmp.ne.s32.totalorder %s143, %s146
      %p155 = scmp.eq.s32.totalorder %s23, 1
      %p156 = por %p154, %p155
      %p157 = scmp.ne.s32.totalorder %s146, %s147
      %p158 = scmp.eq.s32.totalorder %s23, 0
      %p159 = por %p157, %p158
      %p160 = scmp.ne.s32.totalorder %s146, %s147
      %p161 = scmp.eq.s32.totalorder %s24, 1
      %p162 = por %p160, %p161
      %p164 = scmp.ne.s32.totalorder %s147, %s163
      %p165 = scmp.eq.s32.totalorder %s24, 0
      %p166 = por %p164, %p165
      %p167 = scmp.le.s32.totalorder 1, %s18
      %p168 = scmp.lt.s32.totalorder %s18, 3
      %p169 = pnand %p167, %p168
      %p170 = pneg %p169
      // Predicated region
      $region9: #{tpu_custom_call.1} parent=5 // pred_check
        _
      $region10: #{tpu_custom_call.1} parent=5 // pred_check_branch
        %172 = sbr.rel (%p169) target = $region12
      $region11: #{tpu_custom_call.1} parent=5 // pred_region
        %s173 = ssub.s32 %s18, 1
        // Predicated region
        $region13: #{tpu_custom_call.1} parent=11 // pred_check
          %p174 = pneg %p65
        $region14: #{tpu_custom_call.1} parent=11 // pred_check_branch
          %176 = sbr.rel (%p174) target = $region16
        $region15: #{tpu_custom_call.1} parent=11 // pred_region
          _
        $region16: #{tpu_custom_call.1} parent=11 // pred_fallthru
          _
        // Predicated region
        $region17: #{tpu_custom_call.1} parent=11 // pred_check
          %p177 = pneg %p86
        $region18: #{tpu_custom_call.1} parent=11 // pred_check_branch
          %179 = sbr.rel (%p177) target = $region20
        $region19: #{tpu_custom_call.1} parent=11 // pred_region
          _
        $region20: #{tpu_custom_call.1} parent=11 // pred_fallthru
          _
        // Predicated region
        $region21: #{tpu_custom_call.1} parent=11 // pred_check
          %p180 = pneg %p107
        $region22: #{tpu_custom_call.1} parent=11 // pred_check_branch
          %182 = sbr.rel (%p180) target = $region24
        $region23: #{tpu_custom_call.1} parent=11 // pred_region
          _
        $region24: #{tpu_custom_call.1} parent=11 // pred_fallthru
          _
      $region12: #{tpu_custom_call.1} parent=5 // pred_fallthru
        _
      %p183 = scmp.lt.s32.totalorder %s18, 2
      // Predicated region
      $region25: #{tpu_custom_call.1} parent=5 // pred_check
        %p184 = pneg %p183
      $region26: #{tpu_custom_call.1} parent=5 // pred_check_branch
        %186 = sbr.rel (%p184) target = $region28
      $region27: #{tpu_custom_call.1} parent=5 // pred_region
        // Predicated region
        $region29: #{tpu_custom_call.1} parent=27 // pred_check
          %p187 = pneg %p38
        $region30: #{tpu_custom_call.1} parent=27 // pred_check_branch
          %189 = sbr.rel (%p187) target = $region32
        $region31: #{tpu_custom_call.1} parent=27 // pred_region
          %s190 = sand.u32 %s28, 1
          %s191 = sand.u32 %s28, 1
          %s192 = smul.addr %s191, 32
          %s193 = scalar_lea.vmem [#allocation2], %s192
          %s194 = smul.addr %s18, 2
          %s195 = smul.addr %s194, 8
          %s196 = scalar_lea.vmem %s0, %s195
          // Predicated region
          $region33: #{tpu_custom_call.1} parent=31 // pred_check
            _
          $region34: #{tpu_custom_call.1} parent=31 // pred_check_branch
            %198 = sbr.rel (0) target = $region36
          $region35: #{tpu_custom_call.1} parent=31 // pred_region
            // Predicated region
            $region37: #{tpu_custom_call.1} parent=35 // pred_check
              _
            $region38: #{tpu_custom_call.1} parent=35 // pred_check_branch
              %200 = sbr.rel (0) target = $region40
            $region39: #{tpu_custom_call.1} parent=35 // pred_region
              // Predicated region
              $region52: #{tpu_custom_call.1} parent=39 // pred_check
                _
              $region53: #{tpu_custom_call.1} parent=39 // pred_check_branch
                %222 = sbr.rel (0) target = $region55
              $region54: #{tpu_custom_call.1} parent=39 // pred_region
                loop: start=0, step=1, limit=1
                $region56: #{tpu_custom_call.1} parent=54 // loop_pre_header
                  _
                $region57: #{tpu_custom_call.1} parent=54 // loop_header
                  %s224 = sphi 0, %s228
                  %p225 = scmp.ge.s32.totalorder %s224, 1
                  %s229 = sphi %s196, %s196
                  %s230 = sphi %s193, %s193
                $region58: #{tpu_custom_call.1} parent=54 // loop_header_branch
                  %227 = sbr.rel (%p225) target = $region62
                $region59: #{tpu_custom_call.1} parent=54 // loop_body
                  %v231 = vld [vmem:[%s229] sm:$0xff]
                  %232 = vst [vmem:[%s230] sm:$0xff] %v231
                  %v233 = vld [vmem:[%s229 + $0x8] sm:$0xff]
                  %234 = vst [vmem:[%s230 + $0x8] sm:$0xff] %v233
                  %v235 = vld [vmem:[%s229 + $0x20] sm:$0xff]
                  %236 = vst [vmem:[%s230 + $0x10] sm:$0xff] %v235
                  %v237 = vld [vmem:[%s229 + $0x28] sm:$0xff]
                  %238 = vst [vmem:[%s230 + $0x18] sm:$0xff] %v237
                $region60: #{tpu_custom_call.1} parent=54 // loop_footer
                  %s228 = sadd.s32 1, %s224
                $region61: #{tpu_custom_call.1} parent=54 // loop_footer_branch
                  %223 = sbr.rel target = $region57
                $region62: #{tpu_custom_call.1} parent=54 // loop_exit
                  _
              $region55: #{tpu_custom_call.1} parent=39 // pred_fallthru
                _
              // Predicated region
              $region63: #{tpu_custom_call.1} parent=39 // pred_check
                _
              $region64: #{tpu_custom_call.1} parent=39 // pred_check_branch
                %240 = sbr.rel target = $region66
              $region65: #{tpu_custom_call.1} parent=39 // pred_region
                _
              $region66: #{tpu_custom_call.1} parent=39 // pred_fallthru
                _
            $region40: #{tpu_custom_call.1} parent=35 // pred_fallthru
              _
            // Predicated region
            $region41: #{tpu_custom_call.1} parent=35 // pred_check
              _
            $region42: #{tpu_custom_call.1} parent=35 // pred_check_branch
              %202 = sbr.rel target = $region44
            $region43: #{tpu_custom_call.1} parent=35 // pred_region
              %s204 = ssub.s32 256, 1
              loop: start=0, step=1, limit=1
              $region45: #{tpu_custom_call.1} parent=43 // loop_pre_header
                _
              $region46: #{tpu_custom_call.1} parent=43 // loop_header
                %s206 = sphi 0, %s210
                %p207 = scmp.ge.s32.totalorder %s206, 1
                %s211 = sphi %s196, %s196
                %s212 = sphi %s193, %s193
              $region47: #{tpu_custom_call.1} parent=43 // loop_header_branch
                %209 = sbr.rel (%p207) target = $region51
              $region48: #{tpu_custom_call.1} parent=43 // loop_body
                %v213 = vld [vmem:[%s211] sm:%s204]
                %214 = vst [vmem:[%s212] sm:%s204] %v213
                %v215 = vld [vmem:[%s211 + $0x8] sm:%s204]
                %216 = vst [vmem:[%s212 + $0x8] sm:%s204] %v215
                %v217 = vld [vmem:[%s211 + $0x20] sm:%s204]
                %218 = vst [vmem:[%s212 + $0x10] sm:%s204] %v217
                %v219 = vld [vmem:[%s211 + $0x28] sm:%s204]
                %220 = vst [vmem:[%s212 + $0x18] sm:%s204] %v219
              $region49: #{tpu_custom_call.1} parent=43 // loop_footer
                %s210 = sadd.s32 1, %s206
              $region50: #{tpu_custom_call.1} parent=43 // loop_footer_branch
                %205 = sbr.rel target = $region46
              $region51: #{tpu_custom_call.1} parent=43 // loop_exit
                _
            $region44: #{tpu_custom_call.1} parent=35 // pred_fallthru
              _
          $region36: #{tpu_custom_call.1} parent=31 // pred_fallthru
            _
          %241 = vnop
        $region32: #{tpu_custom_call.1} parent=27 // pred_fallthru
          _
      $region28: #{tpu_custom_call.1} parent=5 // pred_fallthru
        _
      %p242 = scmp.le.s32.totalorder 1, %s18
      %p243 = scmp.lt.s32.totalorder %s18, 3
      %p244 = pnand %p242, %p243
      %p245 = pneg %p244
      // Predicated region
      $region67: #{tpu_custom_call.1} parent=5 // pred_check
        _
      $region68: #{tpu_custom_call.1} parent=5 // pred_check_branch
        %247 = sbr.rel (%p244) target = $region70
      $region69: #{tpu_custom_call.1} parent=5 // pred_region
        %s248 = ssub.s32 %s18, 1
        %s249 = sand.u32 %s31, 1
        %s250 = sand.u32 %s31, 1
        %s251 = smul.addr %s250, 32
        %s252 = scalar_lea.vmem [#allocation2], %s251
        // Predicated region
        $region71: #{tpu_custom_call.1} parent=69 // pred_check
          %p253 = pneg %p44
        $region72: #{tpu_custom_call.1} parent=69 // pred_check_branch
          %255 = sbr.rel (%p253) target = $region74
        $region73: #{tpu_custom_call.1} parent=69 // pred_region
          _
        $region74: #{tpu_custom_call.1} parent=69 // pred_fallthru
          _
        %s256 = sand.u32 %s31, 1
        %s257 = sand.u32 %s31, 1
        %s258 = smul.addr %s257, 32
        %s259 = scalar_lea.vmem [#allocation2], %s258
        %p260 = pneg %p44
        %p261 = pneg %p41
        %p262 = pneg %p65
        %p263 = pneg %p62
        %p264 = pneg %p86
        %p265 = pneg %p83
        %p266 = pneg %p107
        %p267 = pneg %p104
        %p268 = pneg %p133
        %p269 = pneg %p130
        %s270 = sand.u32 %s120, 1
        %s271 = scalar_lea.sflag [#allocation4], %s270
        %s272 = sand.u32 %s120, 1
        %s273 = smul.addr %s272, 8
        %s274 = scalar_lea.vmem [#allocation3], %s273
        %p275 = pneg %p159
        %p276 = pneg %p156
        %s277 = sand.u32 %s146, 1
        %s278 = scalar_lea.sflag [#allocation6], %s277
        %s279 = sand.u32 %s146, 1
        %s280 = smul.addr %s279, 2
        %s281 = scalar_lea.vmem [#allocation5], %s280
        %v282 = vld [vmem:[%s1] sm:$0xf]
        %v283 = vld [vmem:[%s252] sm:$0xff]
        %v284 = vld [vmem:[%s252 + $0x8] sm:$0x1]
        %vm285 = vcmask 31744
        %v287 = vsel %vm285, %v283, 0
        %v290 = vsel %vm285, %v284, 0
        %vm292 = vcmask 1043456
        %v294 = vsel %vm292, %v282, 0
        %296 = vmatprep.subr.mxu0 0.0
        %297 = vmatpush1.msra.mxu0 0.0
        %298 = vmatprep.subr.mxu0 0.0
        %299 = vmatpush1.msra.mxu0 0.0
        %300 = vmatprep.subr.mxu0 0.0
        %301 = vmatpush1.msra.mxu0 0.0
        %302 = vmatprep.subr.mxu0 0.0
        %303 = vmatpush1.msra.mxu0 0.0
        %304 = vmatprep.subr.mxu0 0.0
        %305 = vmatpush1.msra.mxu0 0.0
        %306 = vmatprep.subr.mxu0 0.0
        %307 = vmatpush1.msra.mxu0 0.0
        %308 = vmatprep.subr.mxu0 0.0
        %309 = vmatpush1.msra.mxu0 0.0
        %310 = vmatprep.subr.mxu0 0.0
        %311 = vmatpush1.msra.mxu0 0.0
        %312 = vmatprep.subr.mxu0 0.0
        %313 = vmatpush1.msra.mxu0 0.0
        %314 = vmatprep.subr.mxu0 0.0
        %315 = vmatpush1.msra.mxu0 0.0
        %316 = vmatprep.subr.mxu0 0.0
        %317 = vmatpush1.msra.mxu0 0.0
        %318 = vmatprep.subr.mxu0 0.0
        %319 = vmatpush1.msra.mxu0 0.0
        %320 = vmatprep.subr.mxu0 0.0
        %321 = vmatpush1.msra.mxu0 0.0
        %322 = vmatprep.subr.mxu0 0.0
        %323 = vmatpush1.msra.mxu0 0.0
        %324 = vmatprep.subr.mxu0 0.0
        %325 = vmatpush1.msra.mxu0 0.0
        %326 = vmatprep.subr.mxu0 0.0
        %327 = vmatpush1.msra.mxu0 %v294
        %328 = vmatprep.subr.mxu0 0.0
        %329 = vmatpush2.msra.mxu0 0.0
        %330 = vmatprep.subr.mxu0 0.0
        %331 = vmatpush2.msra.mxu0 0.0
        %332 = vmatprep.subr.mxu0 0.0
        %333 = vmatpush2.msra.mxu0 0.0
        %334 = vmatprep.subr.mxu0 0.0
        %335 = vmatpush2.msra.mxu0 0.0
        %336 = vmatprep.subr.mxu0 0.0
        %337 = vmatpush2.msra.mxu0 0.0
        %338 = vmatprep.subr.mxu0 0.0
        %339 = vmatpush2.msra.mxu0 0.0
        %340 = vmatprep.subr.mxu0 0.0
        %341 = vmatpush2.msra.mxu0 0.0
        %342 = vmatprep.subr.mxu0 0.0
        %343 = vmatpush2.msra.mxu0 0.0
        %344 = vmatprep.subr.mxu0 0.0
        %345 = vmatpush2.msra.mxu0 0.0
        %346 = vmatprep.subr.mxu0 0.0
        %347 = vmatpush2.msra.mxu0 0.0
        %348 = vmatprep.subr.mxu0 0.0
        %349 = vmatpush2.msra.mxu0 0.0
        %350 = vmatprep.subr.mxu0 0.0
        %351 = vmatpush2.msra.mxu0 0.0
        %352 = vmatprep.subr.mxu0 0.0
        %353 = vmatpush2.msra.mxu0 0.0
        %354 = vmatprep.subr.mxu0 0.0
        %355 = vmatpush2.msra.mxu0 0.0
        %356 = vmatprep.subr.mxu0 0.0
        %357 = vmatpush2.msra.mxu0 0.0
        %358 = vmatprep.subr.mxu0 0.0
        %359 = vmatpush2.msra.mxu0 0.0
        %360 = vmatprep.mubr.f32.mxu0 0.0
        %361 = vmatmul.mubr.f32.gmra.mxu0 %v287
        %v362 = vpop.f32.mrf.mxu0
        %v363 = vadd.f32 0.0, %v362
        %v364 = vpop.f32.mrf.mxu0
        %365 = vmatprep.mubr.f32.mxu0 0.0
        %366 = vmatmul.mubr.f32.gmra.mxu0 %v290
        %v367 = vpop.f32.mrf.mxu0
        %v368 = vadd.f32 0.0, %v367
        %v369 = vpop.f32.mrf.mxu0
        %370 = vdwg.mxu0
        %s371 = scalar_lea.vmem %s252, 16 [#allocation2]
        %v372 = vld [vmem:[%s371] sm:$0xff]
        %v373 = vld [vmem:[%s371 + $0x8] sm:$0x1]
        %v375 = vsel %vm285, %v372, 0
        %v378 = vsel %vm285, %v373, 0
        %380 = vmatprep.subr.mxu0 0.0
        %381 = vmatpush1.msra.mxu0 0.0
        %382 = vmatprep.subr.mxu0 0.0
        %383 = vmatpush1.msra.mxu0 0.0
        %384 = vmatprep.subr.mxu0 0.0
        %385 = vmatpush1.msra.mxu0 0.0
        %386 = vmatprep.subr.mxu0 0.0
        %387 = vmatpush1.msra.mxu0 0.0
        %388 = vmatprep.subr.mxu0 0.0
        %389 = vmatpush1.msra.mxu0 0.0
        %390 = vmatprep.subr.mxu0 0.0
        %391 = vmatpush1.msra.mxu0 0.0
        %392 = vmatprep.subr.mxu0 0.0
        %393 = vmatpush1.msra.mxu0 0.0
        %394 = vmatprep.subr.mxu0 0.0
        %395 = vmatpush1.msra.mxu0 0.0
        %396 = vmatprep.subr.mxu0 0.0
        %397 = vmatpush1.msra.mxu0 0.0
        %398 = vmatprep.subr.mxu0 0.0
        %399 = vmatpush1.msra.mxu0 0.0
        %400 = vmatprep.subr.mxu0 0.0
        %401 = vmatpush1.msra.mxu0 0.0
        %402 = vmatprep.subr.mxu0 0.0
        %403 = vmatpush1.msra.mxu0 0.0
        %404 = vmatprep.subr.mxu0 0.0
        %405 = vmatpush1.msra.mxu0 0.0
        %406 = vmatprep.subr.mxu0 0.0
        %407 = vmatpush1.msra.mxu0 0.0
        %408 = vmatprep.subr.mxu0 0.0
        %409 = vmatpush1.msra.mxu0 0.0
        %410 = vmatprep.subr.mxu0 0.0
        %411 = vmatpush1.msra.mxu0 %v294
        %412 = vmatprep.subr.mxu0 0.0
        %413 = vmatpush2.msra.mxu0 0.0
        %414 = vmatprep.subr.mxu0 0.0
        %415 = vmatpush2.msra.mxu0 0.0
        %416 = vmatprep.subr.mxu0 0.0
        %417 = vmatpush2.msra.mxu0 0.0
        %418 = vmatprep.subr.mxu0 0.0
        %419 = vmatpush2.msra.mxu0 0.0
        %420 = vmatprep.subr.mxu0 0.0
        %421 = vmatpush2.msra.mxu0 0.0
        %422 = vmatprep.subr.mxu0 0.0
        %423 = vmatpush2.msra.mxu0 0.0
        %424 = vmatprep.subr.mxu0 0.0
        %425 = vmatpush2.msra.mxu0 0.0
        %426 = vmatprep.subr.mxu0 0.0
        %427 = vmatpush2.msra.mxu0 0.0
        %428 = vmatprep.subr.mxu0 0.0
        %429 = vmatpush2.msra.mxu0 0.0
        %430 = vmatprep.subr.mxu0 0.0
        %431 = vmatpush2.msra.mxu0 0.0
        %432 = vmatprep.subr.mxu0 0.0
        %433 = vmatpush2.msra.mxu0 0.0
        %434 = vmatprep.subr.mxu0 0.0
        %435 = vmatpush2.msra.mxu0 0.0
        %436 = vmatprep.subr.mxu0 0.0
        %437 = vmatpush2.msra.mxu0 0.0
        %438 = vmatprep.subr.mxu0 0.0
        %439 = vmatpush2.msra.mxu0 0.0
        %440 = vmatprep.subr.mxu0 0.0
        %441 = vmatpush2.msra.mxu0 0.0
        %442 = vmatprep.subr.mxu0 0.0
        %443 = vmatpush2.msra.mxu0 0.0
        %444 = vmatprep.mubr.f32.mxu0 0.0
        %445 = vmatmul.mubr.f32.gmra.mxu0 %v375
        %v446 = vpop.f32.mrf.mxu0
        %v447 = vadd.f32 0.0, %v446
        %v448 = vpop.f32.mrf.mxu0
        %449 = vmatprep.mubr.f32.mxu0 0.0
        %450 = vmatmul.mubr.f32.gmra.mxu0 %v378
        %v451 = vpop.f32.mrf.mxu0
        %v452 = vpop.f32.mrf.mxu0
        %453 = vdwg.mxu0
        %v454 = vld [vmem:[%s2] sm:$0xff]
        %s455 = scalar_lea.vmem %s2, 8
        %v456 = vld [vmem:[%s455] sm:$0xff]
        %vm457 = vcmask 64512
        %v459 = vsel %vm457, %v447, 0
        %461 = vmatprep.subr.mxu0 0.0
        %462 = vmatpush1.msra.mxu0 0.0
        %463 = vmatprep.subr.mxu0 0.0
        %464 = vmatpush1.msra.mxu0 0.0
        %465 = vmatprep.subr.mxu0 0.0
        %466 = vmatpush1.msra.mxu0 0.0
        %467 = vmatprep.subr.mxu0 0.0
        %468 = vmatpush1.msra.mxu0 0.0
        %469 = vmatprep.subr.mxu0 0.0
        %470 = vmatpush1.msra.mxu0 0.0
        %471 = vmatprep.subr.mxu0 0.0
        %472 = vmatpush1.msra.mxu0 0.0
        %473 = vmatprep.subr.mxu0 0.0
        %474 = vmatpush1.msra.mxu0 0.0
        %475 = vmatprep.subr.mxu0 0.0
        %476 = vmatpush1.msra.mxu0 0.0
        %477 = vmatprep.subr.mxu0 0.0
        %478 = vmatpush1.msra.mxu0 0.0
        %479 = vmatprep.subr.mxu0 0.0
        %480 = vmatpush1.msra.mxu0 0.0
        %481 = vmatprep.subr.mxu0 0.0
        %482 = vmatpush1.msra.mxu0 0.0
        %483 = vmatprep.subr.mxu0 0.0
        %484 = vmatpush1.msra.mxu0 0.0
        %485 = vmatprep.subr.mxu0 0.0
        %486 = vmatpush1.msra.mxu0 0.0
        %487 = vmatprep.subr.mxu0 0.0
        %488 = vmatpush1.msra.mxu0 0.0
        %489 = vmatprep.subr.mxu0 0.0
        %490 = vmatpush1.msra.mxu0 0.0
        %491 = vmatprep.subr.mxu0 0.0
        %492 = vmatpush1.msra.mxu0 %v456
        %493 = vmatprep.subr.mxu0 0.0
        %494 = vmatpush2.msra.mxu0 0.0
        %495 = vmatprep.subr.mxu0 0.0
        %496 = vmatpush2.msra.mxu0 0.0
        %497 = vmatprep.subr.mxu0 0.0
        %498 = vmatpush2.msra.mxu0 0.0
        %499 = vmatprep.subr.mxu0 0.0
        %500 = vmatpush2.msra.mxu0 0.0
        %501 = vmatprep.subr.mxu0 0.0
        %502 = vmatpush2.msra.mxu0 0.0
        %503 = vmatprep.subr.mxu0 0.0
        %504 = vmatpush2.msra.mxu0 0.0
        %505 = vmatprep.subr.mxu0 0.0
        %506 = vmatpush2.msra.mxu0 0.0
        %507 = vmatprep.subr.mxu0 0.0
        %508 = vmatpush2.msra.mxu0 0.0
        %509 = vmatprep.subr.mxu0 0.0
        %510 = vmatpush2.msra.mxu0 0.0
        %511 = vmatprep.subr.mxu0 0.0
        %512 = vmatpush2.msra.mxu0 0.0
        %513 = vmatprep.subr.mxu0 0.0
        %514 = vmatpush2.msra.mxu0 0.0
        %515 = vmatprep.subr.mxu0 0.0
        %516 = vmatpush2.msra.mxu0 0.0
        %517 = vmatprep.subr.mxu0 0.0
        %518 = vmatpush2.msra.mxu0 0.0
        %519 = vmatprep.subr.mxu0 0.0
        %520 = vmatpush2.msra.mxu0 0.0
        %521 = vmatprep.subr.mxu0 0.0
        %522 = vmatpush2.msra.mxu0 0.0
        %523 = vmatprep.subr.mxu0 0.0
        %524 = vmatpush2.msra.mxu0 0.0
        %525 = vmatprep.mubr.f32.mxu0 0.0
        %526 = vmatmul.mubr.f32.gmra.mxu0 %v459
        %v527 = vpop.f32.mrf.mxu0
        %v528 = vadd.f32 0.0, %v527
        %v529 = vpop.f32.mrf.mxu0
        %530 = vdwg.mxu0
        %v532 = vsel %vm457, %v363, 0
        %534 = vmatprep.subr.mxu0 0.0
        %535 = vmatpush1.msra.mxu0 0.0
        %536 = vmatprep.subr.mxu0 0.0
        %537 = vmatpush1.msra.mxu0 0.0
        %538 = vmatprep.subr.mxu0 0.0
        %539 = vmatpush1.msra.mxu0 0.0
        %540 = vmatprep.subr.mxu0 0.0
        %541 = vmatpush1.msra.mxu0 0.0
        %542 = vmatprep.subr.mxu0 0.0
        %543 = vmatpush1.msra.mxu0 0.0
        %544 = vmatprep.subr.mxu0 0.0
        %545 = vmatpush1.msra.mxu0 0.0
        %546 = vmatprep.subr.mxu0 0.0
        %547 = vmatpush1.msra.mxu0 0.0
        %548 = vmatprep.subr.mxu0 0.0
        %549 = vmatpush1.msra.mxu0 0.0
        %550 = vmatprep.subr.mxu0 0.0
        %551 = vmatpush1.msra.mxu0 0.0
        %552 = vmatprep.subr.mxu0 0.0
        %553 = vmatpush1.msra.mxu0 0.0
        %554 = vmatprep.subr.mxu0 0.0
        %555 = vmatpush1.msra.mxu0 0.0
        %556 = vmatprep.subr.mxu0 0.0
        %557 = vmatpush1.msra.mxu0 0.0
        %558 = vmatprep.subr.mxu0 0.0
        %559 = vmatpush1.msra.mxu0 0.0
        %560 = vmatprep.subr.mxu0 0.0
        %561 = vmatpush1.msra.mxu0 0.0
        %562 = vmatprep.subr.mxu0 0.0
        %563 = vmatpush1.msra.mxu0 0.0
        %564 = vmatprep.subr.mxu0 0.0
        %565 = vmatpush1.msra.mxu0 %v454
        %566 = vmatprep.subr.mxu0 0.0
        %567 = vmatpush2.msra.mxu0 0.0
        %568 = vmatprep.subr.mxu0 0.0
        %569 = vmatpush2.msra.mxu0 0.0
        %570 = vmatprep.subr.mxu0 0.0
        %571 = vmatpush2.msra.mxu0 0.0
        %572 = vmatprep.subr.mxu0 0.0
        %573 = vmatpush2.msra.mxu0 0.0
        %574 = vmatprep.subr.mxu0 0.0
        %575 = vmatpush2.msra.mxu0 0.0
        %576 = vmatprep.subr.mxu0 0.0
        %577 = vmatpush2.msra.mxu0 0.0
        %578 = vmatprep.subr.mxu0 0.0
        %579 = vmatpush2.msra.mxu0 0.0
        %580 = vmatprep.subr.mxu0 0.0
        %581 = vmatpush2.msra.mxu0 0.0
        %582 = vmatprep.subr.mxu0 0.0
        %583 = vmatpush2.msra.mxu0 0.0
        %584 = vmatprep.subr.mxu0 0.0
        %585 = vmatpush2.msra.mxu0 0.0
        %586 = vmatprep.subr.mxu0 0.0
        %587 = vmatpush2.msra.mxu0 0.0
        %588 = vmatprep.subr.mxu0 0.0
        %589 = vmatpush2.msra.mxu0 0.0
        %590 = vmatprep.subr.mxu0 0.0
        %591 = vmatpush2.msra.mxu0 0.0
        %592 = vmatprep.subr.mxu0 0.0
        %593 = vmatpush2.msra.mxu0 0.0
        %594 = vmatprep.subr.mxu0 0.0
        %595 = vmatpush2.msra.mxu0 0.0
        %596 = vmatprep.subr.mxu0 0.0
        %597 = vmatpush2.msra.mxu0 0.0
        %598 = vmatprep.mubr.f32.mxu0 0.0
        %599 = vmatmul.mubr.f32.gmra.mxu0 %v532
        %v600 = vpop.f32.mrf.mxu0
        %v601 = vadd.f32 %v528, %v600
        %v602 = vpop.f32.mrf.mxu0
        %603 = vdwg.mxu0
        %s604 = scalar_lea.vmem %s2, 16
        %v605 = vld [vmem:[%s604] sm:$0xff]
        %vm607 = vcmask 1046528
        %v608 = vrot.slane %v363, 1
        %v609 = vrot.slane %v368, 1
        %v610 = vsel %vm607, %v608, %v609
        %v611 = vsel %vm457, %v610, 0
        %613 = vmatprep.subr.mxu0 0.0
        %614 = vmatpush1.msra.mxu0 0.0
        %615 = vmatprep.subr.mxu0 0.0
        %616 = vmatpush1.msra.mxu0 0.0
        %617 = vmatprep.subr.mxu0 0.0
        %618 = vmatpush1.msra.mxu0 0.0
        %619 = vmatprep.subr.mxu0 0.0
        %620 = vmatpush1.msra.mxu0 0.0
        %621 = vmatprep.subr.mxu0 0.0
        %622 = vmatpush1.msra.mxu0 0.0
        %623 = vmatprep.subr.mxu0 0.0
        %624 = vmatpush1.msra.mxu0 0.0
        %625 = vmatprep.subr.mxu0 0.0
        %626 = vmatpush1.msra.mxu0 0.0
        %627 = vmatprep.subr.mxu0 0.0
        %628 = vmatpush1.msra.mxu0 0.0
        %629 = vmatprep.subr.mxu0 0.0
        %630 = vmatpush1.msra.mxu0 0.0
        %631 = vmatprep.subr.mxu0 0.0
        %632 = vmatpush1.msra.mxu0 0.0
        %633 = vmatprep.subr.mxu0 0.0
        %634 = vmatpush1.msra.mxu0 0.0
        %635 = vmatprep.subr.mxu0 0.0
        %636 = vmatpush1.msra.mxu0 0.0
        %637 = vmatprep.subr.mxu0 0.0
        %638 = vmatpush1.msra.mxu0 0.0
        %639 = vmatprep.subr.mxu0 0.0
        %640 = vmatpush1.msra.mxu0 0.0
        %641 = vmatprep.subr.mxu0 0.0
        %642 = vmatpush1.msra.mxu0 0.0
        %643 = vmatprep.subr.mxu0 0.0
        %644 = vmatpush1.msra.mxu0 %v605
        %645 = vmatprep.subr.mxu0 0.0
        %646 = vmatpush2.msra.mxu0 0.0
        %647 = vmatprep.subr.mxu0 0.0
        %648 = vmatpush2.msra.mxu0 0.0
        %649 = vmatprep.subr.mxu0 0.0
        %650 = vmatpush2.msra.mxu0 0.0
        %651 = vmatprep.subr.mxu0 0.0
        %652 = vmatpush2.msra.mxu0 0.0
        %653 = vmatprep.subr.mxu0 0.0
        %654 = vmatpush2.msra.mxu0 0.0
        %655 = vmatprep.subr.mxu0 0.0
        %656 = vmatpush2.msra.mxu0 0.0
        %657 = vmatprep.subr.mxu0 0.0
        %658 = vmatpush2.msra.mxu0 0.0
        %659 = vmatprep.subr.mxu0 0.0
        %660 = vmatpush2.msra.mxu0 0.0
        %661 = vmatprep.subr.mxu0 0.0
        %662 = vmatpush2.msra.mxu0 0.0
        %663 = vmatprep.subr.mxu0 0.0
        %664 = vmatpush2.msra.mxu0 0.0
        %665 = vmatprep.subr.mxu0 0.0
        %666 = vmatpush2.msra.mxu0 0.0
        %667 = vmatprep.subr.mxu0 0.0
        %668 = vmatpush2.msra.mxu0 0.0
        %669 = vmatprep.subr.mxu0 0.0
        %670 = vmatpush2.msra.mxu0 0.0
        %671 = vmatprep.subr.mxu0 0.0
        %672 = vmatpush2.msra.mxu0 0.0
        %673 = vmatprep.subr.mxu0 0.0
        %674 = vmatpush2.msra.mxu0 0.0
        %675 = vmatprep.subr.mxu0 0.0
        %676 = vmatpush2.msra.mxu0 0.0
        %677 = vmatprep.mubr.f32.mxu0 0.0
        %678 = vmatmul.mubr.f32.gmra.mxu0 %v611
        %v679 = vpop.f32.mrf.mxu0
        %v680 = vadd.f32 0.0, %v679
        %v681 = vpop.f32.mrf.mxu0
        %682 = vdwg.mxu0
        %v683 = vadd.f32 %v601, %v680
        %v684 = vld [vmem:[%s3] sm:$0x1]
        %v686 = vlaneseq
        %v687 = vshrl.u32 %v686, 7
        %v688 = vsub.s32 0, %v687
        %v689 = vrot.slane %v684, %v688
        %v691 = vadd.f32 %v683, %v689
        %vm692 = vcmask 261120
        %693 = vst.msk [vmem:[%s274] sm:$0xff] %vm692, %v691
        %v694 = vsel %vm692, %v691, 0.0
        %v695 = vrot.slane %v694, 4
        %v696 = vadd.f32 %v694, %v695
        %v697 = vrot.slane %v696, 2
        %v698 = vadd.f32 %v696, %v697
        %v699 = vrot.slane %v698, 1
        %v700 = vadd.f32 %v698, %v699
        %v701 = vmul.f32 %v691, %v691
        %v702 = vsel %vm692, %v701, 0.0
        %v703 = vrot.slane %v702, 4
        %v704 = vadd.f32 %v702, %v703
        %v705 = vrot.slane %v704, 2
        %v706 = vadd.f32 %v704, %v705
        %v707 = vrot.slane %v706, 1
        %v708 = vadd.f32 %v706, %v707
        %vm709 = vcmask 1040384
        %v710 = vsel %vm709, %v700, %v708
        %vm711 = vcmask 254976
        %712 = vst.msk [vmem:[%s281] sm:$0x3] %vm711, %v710
        %s713 = sand.u32 %s120, 1
        %s714 = scalar_lea.sflag [#allocation4], %s713
        %s715 = sand.u32 %s120, 1
        %s716 = smul.addr %s715, 8
        %s717 = scalar_lea.vmem [#allocation3], %s716
        %s718 = sand.u32 %s146, 1
        %s719 = scalar_lea.sflag [#allocation6], %s718
        %s720 = sand.u32 %s146, 1
        %s721 = smul.addr %s720, 2
        %s722 = scalar_lea.vmem [#allocation5], %s721
        // Predicated region
        $region75: #{tpu_custom_call.1} parent=69 // pred_check
          %p723 = pneg %p130
        $region76: #{tpu_custom_call.1} parent=69 // pred_check_branch
          %725 = sbr.rel (%p723) target = $region78
        $region77: #{tpu_custom_call.1} parent=69 // pred_region
          %s727 = ssub.s32 128, 128
          %728 = vsyncadd %s714, %s727
          %s729 = smul.addr %s23, 128
          %s730 = scalar_lea.hbm %s4, %s729
          %s732 = sshll.u32 %s717, 4
          %s733 = int_to_ptr.vmem [resolvable:$true] %s732
          %735 = dma.vmem_to_hbm [thread:$0]  %s733, 128, %s730, %s714
        $region78: #{tpu_custom_call.1} parent=69 // pred_fallthru
          _
        // Predicated region
        $region79: #{tpu_custom_call.1} parent=69 // pred_check
          %p736 = pneg %p156
        $region80: #{tpu_custom_call.1} parent=69 // pred_check_branch
          %738 = sbr.rel (%p736) target = $region82
        $region81: #{tpu_custom_call.1} parent=69 // pred_region
          %s740 = ssub.s32 32, 32
          %741 = vsyncadd %s719, %s740
          %s742 = smul.addr %s23, 32
          %s743 = scalar_lea.hbm %s5, %s742
          %s745 = sshll.u32 %s722, 4
          %s746 = int_to_ptr.vmem [resolvable:$true] %s745
          %748 = dma.vmem_to_hbm [thread:$0]  %s746, 32, %s743, %s719
        $region82: #{tpu_custom_call.1} parent=69 // pred_fallthru
          _
      $region70: #{tpu_custom_call.1} parent=5 // pred_fallthru
        _
      %p749 = scmp.le.s32.totalorder 2, %s18
      // Predicated region
      $region83: #{tpu_custom_call.1} parent=5 // pred_check
        %p750 = pneg %p749
      $region84: #{tpu_custom_call.1} parent=5 // pred_check_branch
        %752 = sbr.rel (%p750) target = $region86
      $region85: #{tpu_custom_call.1} parent=5 // pred_region
        %s753 = ssub.s32 %s18, 2
        // Predicated region
        $region87: #{tpu_custom_call.1} parent=85 // pred_check
          %p754 = pneg %p136
        $region88: #{tpu_custom_call.1} parent=85 // pred_check_branch
          %756 = sbr.rel (%p754) target = $region90
        $region89: #{tpu_custom_call.1} parent=85 // pred_region
          %s757 = sand.u32 %s121, 1
          %s758 = scalar_lea.sflag [#allocation4], %s757
          %s759 = sand.u32 %s121, 1
          %s760 = smul.addr %s759, 8
          %s761 = scalar_lea.vmem [#allocation3], %s760
          %762 = dma.done %s758, 128
        $region90: #{tpu_custom_call.1} parent=85 // pred_fallthru
          _
        // Predicated region
        $region91: #{tpu_custom_call.1} parent=85 // pred_check
          %p763 = pneg %p162
        $region92: #{tpu_custom_call.1} parent=85 // pred_check_branch
          %765 = sbr.rel (%p763) target = $region94
        $region93: #{tpu_custom_call.1} parent=85 // pred_region
          %s766 = sand.u32 %s147, 1
          %s767 = scalar_lea.sflag [#allocation6], %s766
          %s768 = sand.u32 %s147, 1
          %s769 = smul.addr %s768, 2
          %s770 = scalar_lea.vmem [#allocation5], %s769
          %771 = dma.done %s767, 32
        $region94: #{tpu_custom_call.1} parent=85 // pred_fallthru
          _
      $region86: #{tpu_custom_call.1} parent=5 // pred_fallthru
        _
    $region6: #{tpu_custom_call.1} parent=1 // loop_footer
      %s22 = sadd.s32 1, %s18
    $region7: #{tpu_custom_call.1} parent=1 // loop_footer_branch
      %17 = sbr.rel target = $region3
    $region8: #{tpu_custom_call.1} parent=1 // loop_exit
      _
    %772 = vsyncpa [#allocation4], 1
    %s773 = scalar_lea.sflag [#allocation4], 1
    %774 = vsyncpa %s773, 1
    %775 = vsyncpa [#allocation6], 1
    %s776 = scalar_lea.sflag [#allocation6], 1
    %777 = vsyncpa %s776, 1

</llo_original>
